<compile_context>
chip_gen: v7x
topology: tpu7x:2x2x1
jax: 0.10.0
libtpu: 0.0.40
codegen_flags: <defaults>
</compile_context>

<pallas_src>
import functools

import jax
import jax.numpy as jnp
import numpy as np
from jax import lax
from jax.experimental import pallas as pl
from jax.experimental.pallas import tpu as pltpu

_EPS = 1e-5
_VMEM = pl.BlockSpec(memory_space=pltpu.MemorySpace.VMEM)


# ---------------------------------------------------------------- kernel ----
def _down_fused_kernel(xc_ref, mask_ref, w1_ref, g1_ref, b1_ref,
                       w2_ref, g2_ref, b2_ref, o_ref, *, wp):
    """MaxPool2d(2) + (conv3x3 -> BN(train) -> ReLU) x 2, all in one kernel.

    xc_ref  : (4, Cpad, M)   the 4 corners of every 2x2 pool window, M = N*Hp*Wp
    mask_ref: (9, M)         per-tap zero-padding boundary masks (f32 0/1)
    w*_ref  : (Cout, 9*Cpad) conv weights, tap-major columns (t*Cpad + c)
    g*/b*   : (Cout, 1)      BatchNorm affine parameters
    o_ref   : (Cout, M)      lane-dense output
    """
    m = o_ref.shape[-1]
    f32 = jnp.float32
    inv_m = 1.0 / m

    # ---- MaxPool2d(kernel=2, stride=2): max of the 4 window corners. (Cpad, M)
    pooled = jnp.maximum(jnp.maximum(xc_ref[0], xc_ref[1]),
                         jnp.maximum(xc_ref[2], xc_ref[3])).astype(f32)

    masks = mask_ref[...]                                       # (9, M)
    offs = tuple(dh * wp + dw for dh in (-1, 0, 1) for dw in (-1, 0, 1))

    def conv3x3_bn_relu(h_cm, w_ref, g_ref, b_ref):
        # Tap shifts on the XLU (lane rotation) + boundary-mask multiply on the
        # VPU.  The mask also zeroes values that wrapped across row / image
        # boundaries, so the cyclic roll is safe (padding=1 semantics).
        taps = []
        for t, off in enumerate(offs):
            shifted = h_cm if off == 0 else pltpu.roll(
                h_cm, shift=(-off) % m, axis=1)
            taps.append(shifted * masks[t:t + 1, :])
        # Channel dim is padded to a multiple of 8, so this sublane concat is
        # tile-aligned: (9*Cpad, M).
        stacked = jnp.concatenate(taps, axis=0)

        # Single channel-mix matmul per stage on the MXU.
        acc = jnp.dot(w_ref[...], stacked, preferred_element_type=f32)

        # BatchNorm2d training-mode statistics over (N, Hp, Wp) == the full
        # lane axis (biased variance, like PyTorch), affine folded in.
        s1 = jnp.sum(acc, axis=-1, keepdims=True)
        s2 = jnp.sum(acc * acc, axis=-1, keepdims=True)
        mean = s1 * inv_m
        var = s2 * inv_m - mean * mean
        scale = g_ref[...] * lax.rsqrt(var + _EPS)
        shift = b_ref[...] - mean * scale
        return jnp.maximum(acc * scale + shift, 0.0)            # ReLU

    h1 = conv3x3_bn_relu(pooled, w1_ref, g1_ref, b1_ref)        # stays in VMEM
    o_ref[...] = conv3x3_bn_relu(h1, w2_ref, g2_ref, b2_ref)


# --------------------------------------------------------------- wrappers ---
def _pack_weight(w_oihw, cin_pad):
    """(O, I, 3, 3) -> (O, 9*cin_pad), column index = (kh*3 + kw)*cin_pad + c."""
    o, i, kh, kw = w_oihw.shape
    w = jnp.transpose(w_oihw, (0, 2, 3, 1))                     # (O, KH, KW, I)
    if cin_pad > i:
        w = jnp.pad(w, ((0, 0), (0, 0), (0, 0), (0, cin_pad - i)))
    return w.reshape(o, kh * kw * cin_pad)


def prepare_down_params(w1, g1, b1, w2, g2, b2):
    """Repack PyTorch-layout parameters once (hoisted out of the forward)."""
    cin = w1.shape[1]
    cmid = w2.shape[1]
    cin_pad = ((cin + 7) // 8) * 8        # pad channels to a sublane multiple
    cmid_pad = ((cmid + 7) // 8) * 8      # so the in-kernel stacking is aligned
    assert cmid_pad == cmid, "mid_channels must be a multiple of 8"
    return (_pack_weight(w1, cin_pad), g1.reshape(-1, 1), b1.reshape(-1, 1),
            _pack_weight(w2, cmid_pad), g2.reshape(-1, 1), b2.reshape(-1, 1))


def _boundary_masks(n, hp, wp):
    """(9, N*Hp*Wp) f32 validity masks for the 3x3 taps (conv padding=1)."""
    j = np.arange(n * hp * wp)
    jrow = (j // wp) % hp
    jcol = j % wp
    rows = []
    for dh in (-1, 0, 1):
        for dw in (-1, 0, 1):
            rows.append(((jrow + dh >= 0) & (jrow + dh < hp) &
                         (jcol + dw >= 0) & (jcol + dw < wp))
                        .astype(np.float32))
    return np.stack(rows, axis=0)


@jax.jit
def down_forward(x_nchw, w1t, g1, b1, w2t, g2, b2):
    """Down.forward: MaxPool2d(2) -> DoubleConv, fused into one Pallas call."""
    n, cin, h, w = x_nchw.shape
    hp, wp = h // 2, w // 2
    m = n * hp * wp
    cin_pad = w1t.shape[1] // 9
    cout = w2t.shape[0]

    # 2x2 pool-window corners in (corner, Cpad, M) layout with flattened
    # spatial (n, hp, wp) in lanes.
    # TODO(synk): fold this corner extraction into the kernel (strided reads)
    # at realistic sizes to remove the extra HBM pass.
    xc = x_nchw.reshape(n, cin, hp, 2, wp, 2)
    xc = jnp.transpose(xc, (3, 5, 1, 0, 2, 4)).reshape(4, cin, m)
    if cin_pad > cin:
        xc = jnp.pad(xc, ((0, 0), (0, cin_pad - cin), (0, 0)))

    masks = jnp.asarray(_boundary_masks(n, hp, wp))      # trace-time constant

    out_cm = pl.pallas_call(
        functools.partial(_down_fused_kernel, wp=wp),
        out_shape=jax.ShapeDtypeStruct((cout, m), jnp.float32),
        in_specs=[_VMEM] * 8,
        out_specs=_VMEM,
    )(xc, masks, w1t, g1, b1, w2t, g2, b2)

    # (Cout, M) -> (Cout, N, Hp, Wp) is a free reshape; only a leading-axis
    # permute remains to produce NCHW (does not touch the lane dimension).
    return jnp.transpose(out_cm.reshape(cout, n, hp, wp), (1, 0, 2, 3))


# ------------------------------------------------------------- reference ---
def _reference(x_nchw, w1, g1, b1, w2, g2, b2):
    x = jnp.transpose(x_nchw, (0, 2, 3, 1))
    x = lax.reduce_window(x, -jnp.inf, lax.max, (1, 2, 2, 1), (1, 2, 2, 1),
                          "VALID")

    def block(hh, w_oihw, g, bta):
        w_hwio = jnp.transpose(w_oihw, (2, 3, 1, 0))
        y = lax.conv_general_dilated(hh, w_hwio, (1, 1), "SAME",
                                     dimension_numbers=("NHWC", "HWIO", "NHWC"))
        mu = jnp.mean(y, axis=(0, 1, 2), keepdims=True)
        var = jnp.mean((y - mu) ** 2, axis=(0, 1, 2), keepdims=True)
        y = (y - mu) * lax.rsqrt(var + _EPS) * g + bta
        return jnp.maximum(y, 0.0)

    x = block(x, w1, g1, b1)
    x = block(x, w2, g2, b2)
    return jnp.transpose(x, (0, 3, 1, 2))


# ------------------------------------------------------------------- main ---
if __name__ == "__main__":
    key = jax.random.PRNGKey(0)
    ks = jax.random.split(key, 8)

    N, Cin, H, W = 2, 4, 16, 16
    Cout = 8  # Down(in_channels=4, out_channels=8); mid_channels == out_channels

    x = jax.random.normal(ks[0], (N, Cin, H, W), jnp.float32)
    w1 = 0.1 * jax.random.normal(ks[1], (Cout, Cin, 3, 3), jnp.float32)
    w2 = 0.1 * jax.random.normal(ks[2], (Cout, Cout, 3, 3), jnp.float32)
    g1 = 1.0 + 0.05 * jax.random.normal(ks[3], (Cout,), jnp.float32)
    b1 = 0.05 * jax.random.normal(ks[4], (Cout,), jnp.float32)
    g2 = 1.0 + 0.05 * jax.random.normal(ks[5], (Cout,), jnp.float32)
    b2 = 0.05 * jax.random.normal(ks[6], (Cout,), jnp.float32)

    params = prepare_down_params(w1, g1, b1, w2, g2, b2)

    out = down_forward(x, *params)
    out = jax.block_until_ready(out)
    assert out.shape == (N, Cout, H // 2, W // 2)

    ref = jax.block_until_ready(_reference(x, w1, g1, b1, w2, g2, b2))
    np.testing.assert_allclose(np.asarray(out), np.asarray(ref),
                               rtol=2e-3, atol=2e-3)

    print("KERNEL_OK")
</pallas_src>

<mosaic_0001>
module attributes {stable_mosaic.version = 11 : i64} {
  func.func @_down_fused_kernel(%arg0: memref<4x8x128xf32, #tpu.memory_space<vmem>>, %arg1: memref<9x128xf32, #tpu.memory_space<vmem>>, %arg2: memref<8x72xf32, #tpu.memory_space<vmem>>, %arg3: memref<8x1xf32, #tpu.memory_space<vmem>>, %arg4: memref<8x1xf32, #tpu.memory_space<vmem>>, %arg5: memref<8x72xf32, #tpu.memory_space<vmem>>, %arg6: memref<8x1xf32, #tpu.memory_space<vmem>>, %arg7: memref<8x1xf32, #tpu.memory_space<vmem>>, %arg8: memref<8x128xf32, #tpu.memory_space<vmem>>) attributes {dimension_semantics = [], scalar_prefetch = 0 : i64, scratch_operands = 0 : i64, tpu.core_type = #tpu.core_type<tc>} {
    %c0 = arith.constant 0 : index
    %c0_0 = arith.constant 0 : index
    %c0_1 = arith.constant 0 : index
    %0 = vector.load %arg0[%c0, %c0_0, %c0_1] : memref<4x8x128xf32, #tpu.memory_space<vmem>>, vector<1x8x128xf32>
    %1 = vector.shape_cast %0 : vector<1x8x128xf32> to vector<8x128xf32>
    %c1 = arith.constant 1 : index
    %c0_2 = arith.constant 0 : index
    %c0_3 = arith.constant 0 : index
    %2 = vector.load %arg0[%c1, %c0_2, %c0_3] : memref<4x8x128xf32, #tpu.memory_space<vmem>>, vector<1x8x128xf32>
    %3 = vector.shape_cast %2 : vector<1x8x128xf32> to vector<8x128xf32>
    %4 = arith.maximumf %1, %3 : vector<8x128xf32>
    %c2 = arith.constant 2 : index
    %c0_4 = arith.constant 0 : index
    %c0_5 = arith.constant 0 : index
    %5 = vector.load %arg0[%c2, %c0_4, %c0_5] : memref<4x8x128xf32, #tpu.memory_space<vmem>>, vector<1x8x128xf32>
    %6 = vector.shape_cast %5 : vector<1x8x128xf32> to vector<8x128xf32>
    %c3 = arith.constant 3 : index
    %c0_6 = arith.constant 0 : index
    %c0_7 = arith.constant 0 : index
    %7 = vector.load %arg0[%c3, %c0_6, %c0_7] : memref<4x8x128xf32, #tpu.memory_space<vmem>>, vector<1x8x128xf32>
    %8 = vector.shape_cast %7 : vector<1x8x128xf32> to vector<8x128xf32>
    %9 = arith.maximumf %6, %8 : vector<8x128xf32>
    %10 = arith.maximumf %4, %9 : vector<8x128xf32>
    %c0_8 = arith.constant 0 : index
    %c0_9 = arith.constant 0 : index
    %11 = vector.load %arg1[%c0_8, %c0_9] : memref<9x128xf32, #tpu.memory_space<vmem>>, vector<9x128xf32>
    %c9_i32 = arith.constant 9 : i32
    %12 = tpu.dynamic_rotate %10 by %c9_i32 dim 1 : vector<8x128xf32>, i32 -> vector<8x128xf32>
    %13 = vector.extract_strided_slice %11 {offsets = [0, 0], sizes = [1, 128], strides = [1, 1]} : vector<9x128xf32> to vector<1x128xf32>
    %14 = vector.broadcast %13 : vector<1x128xf32> to vector<8x128xf32>
    %15 = arith.mulf %12, %14 : vector<8x128xf32>
    %c8_i32 = arith.constant 8 : i32
    %16 = tpu.dynamic_rotate %10 by %c8_i32 dim 1 : vector<8x128xf32>, i32 -> vector<8x128xf32>
    %17 = vector.extract_strided_slice %11 {offsets = [1, 0], sizes = [1, 128], strides = [1, 1]} : vector<9x128xf32> to vector<1x128xf32>
    %18 = vector.broadcast %17 : vector<1x128xf32> to vector<8x128xf32>
    %19 = arith.mulf %16, %18 : vector<8x128xf32>
    %c7_i32 = arith.constant 7 : i32
    %20 = tpu.dynamic_rotate %10 by %c7_i32 dim 1 : vector<8x128xf32>, i32 -> vector<8x128xf32>
    %21 = vector.extract_strided_slice %11 {offsets = [2, 0], sizes = [1, 128], strides = [1, 1]} : vector<9x128xf32> to vector<1x128xf32>
    %22 = vector.broadcast %21 : vector<1x128xf32> to vector<8x128xf32>
    %23 = arith.mulf %20, %22 : vector<8x128xf32>
    %c1_i32 = arith.constant 1 : i32
    %24 = tpu.dynamic_rotate %10 by %c1_i32 dim 1 : vector<8x128xf32>, i32 -> vector<8x128xf32>
    %25 = vector.extract_strided_slice %11 {offsets = [3, 0], sizes = [1, 128], strides = [1, 1]} : vector<9x128xf32> to vector<1x128xf32>
    %26 = vector.broadcast %25 : vector<1x128xf32> to vector<8x128xf32>
    %27 = arith.mulf %24, %26 : vector<8x128xf32>
    %28 = vector.extract_strided_slice %11 {offsets = [4, 0], sizes = [1, 128], strides = [1, 1]} : vector<9x128xf32> to vector<1x128xf32>
    %29 = vector.broadcast %28 : vector<1x128xf32> to vector<8x128xf32>
    %30 = arith.mulf %10, %29 : vector<8x128xf32>
    %c127_i32 = arith.constant 127 : i32
    %31 = tpu.dynamic_rotate %10 by %c127_i32 dim 1 : vector<8x128xf32>, i32 -> vector<8x128xf32>
    %32 = vector.extract_strided_slice %11 {offsets = [5, 0], sizes = [1, 128], strides = [1, 1]} : vector<9x128xf32> to vector<1x128xf32>
    %33 = vector.broadcast %32 : vector<1x128xf32> to vector<8x128xf32>
    %34 = arith.mulf %31, %33 : vector<8x128xf32>
    %c121_i32 = arith.constant 121 : i32
    %35 = tpu.dynamic_rotate %10 by %c121_i32 dim 1 : vector<8x128xf32>, i32 -> vector<8x128xf32>
    %36 = vector.extract_strided_slice %11 {offsets = [6, 0], sizes = [1, 128], strides = [1, 1]} : vector<9x128xf32> to vector<1x128xf32>
    %37 = vector.broadcast %36 : vector<1x128xf32> to vector<8x128xf32>
    %38 = arith.mulf %35, %37 : vector<8x128xf32>
    %c120_i32 = arith.constant 120 : i32
    %39 = tpu.dynamic_rotate %10 by %c120_i32 dim 1 : vector<8x128xf32>, i32 -> vector<8x128xf32>
    %40 = vector.extract_strided_slice %11 {offsets = [7, 0], sizes = [1, 128], strides = [1, 1]} : vector<9x128xf32> to vector<1x128xf32>
    %41 = vector.broadcast %40 : vector<1x128xf32> to vector<8x128xf32>
    %42 = arith.mulf %39, %41 : vector<8x128xf32>
    %c119_i32 = arith.constant 119 : i32
    %43 = tpu.dynamic_rotate %10 by %c119_i32 dim 1 : vector<8x128xf32>, i32 -> vector<8x128xf32>
    %44 = vector.extract_strided_slice %11 {offsets = [8, 0], sizes = [1, 128], strides = [1, 1]} : vector<9x128xf32> to vector<1x128xf32>
    %45 = vector.broadcast %44 : vector<1x128xf32> to vector<8x128xf32>
    %46 = arith.mulf %43, %45 : vector<8x128xf32>
    %47 = tpu.concatenate %15, %19, %23, %27, %30, %34, %38, %42, %46 in 0 : vector<8x128xf32>, vector<8x128xf32>, vector<8x128xf32>, vector<8x128xf32>, vector<8x128xf32>, vector<8x128xf32>, vector<8x128xf32>, vector<8x128xf32>, vector<8x128xf32> -> vector<72x128xf32>
    %c0_10 = arith.constant 0 : index
    %c0_11 = arith.constant 0 : index
    %48 = vector.load %arg2[%c0_10, %c0_11] : memref<8x72xf32, #tpu.memory_space<vmem>>, vector<8x72xf32>
    %cst = arith.constant dense<0.000000e+00> : vector<8x128xf32>
    %49 = tpu.matmul %48, %47, %cst {dimension_numbers = #tpu.dot_dimension_numbers<[1], [0], [0], [1], [0, 0, 1, 1], [], []>} : vector<8x72xf32>, vector<72x128xf32>, vector<8x128xf32> -> vector<8x128xf32>
    %cst_12 = arith.constant dense<0.000000e+00> : vector<8xf32>
    %50 = vector.multi_reduction <add>, %49, %cst_12 [1] : vector<8x128xf32> to vector<8xf32>
    %51 = vector.shape_cast %50 : vector<8xf32> to vector<8x1xf32>
    %52 = arith.mulf %49, %49 : vector<8x128xf32>
    %cst_13 = arith.constant dense<0.000000e+00> : vector<8xf32>
    %53 = vector.multi_reduction <add>, %52, %cst_13 [1] : vector<8x128xf32> to vector<8xf32>
    %54 = vector.shape_cast %53 : vector<8xf32> to vector<8x1xf32>
    %cst_14 = arith.constant 7.812500e-03 : f32
    %55 = vector.broadcast %cst_14 : f32 to vector<8x1xf32>
    %56 = arith.mulf %51, %55 : vector<8x1xf32>
    %cst_15 = arith.constant 7.812500e-03 : f32
    %57 = vector.broadcast %cst_15 : f32 to vector<8x1xf32>
    %58 = arith.mulf %54, %57 : vector<8x1xf32>
    %59 = arith.mulf %56, %56 : vector<8x1xf32>
    %60 = arith.subf %58, %59 : vector<8x1xf32>
    %c0_16 = arith.constant 0 : index
    %c0_17 = arith.constant 0 : index
    %61 = vector.load %arg3[%c0_16, %c0_17] : memref<8x1xf32, #tpu.memory_space<vmem>>, vector<8x1xf32>
    %cst_18 = arith.constant 9.99999974E-6 : f32
    %62 = vector.broadcast %cst_18 : f32 to vector<8x1xf32>
    %63 = arith.addf %60, %62 : vector<8x1xf32>
    %64 = math.rsqrt %63 : vector<8x1xf32>
    %65 = arith.mulf %61, %64 : vector<8x1xf32>
    %c0_19 = arith.constant 0 : index
    %c0_20 = arith.constant 0 : index
    %66 = vector.load %arg4[%c0_19, %c0_20] : memref<8x1xf32, #tpu.memory_space<vmem>>, vector<8x1xf32>
    %67 = arith.mulf %56, %65 : vector<8x1xf32>
    %68 = arith.subf %66, %67 : vector<8x1xf32>
    %69 = vector.broadcast %65 : vector<8x1xf32> to vector<8x128xf32>
    %70 = arith.mulf %49, %69 : vector<8x128xf32>
    %71 = vector.broadcast %68 : vector<8x1xf32> to vector<8x128xf32>
    %72 = arith.addf %70, %71 : vector<8x128xf32>
    %cst_21 = arith.constant 0.000000e+00 : f32
    %73 = vector.broadcast %cst_21 : f32 to vector<8x128xf32>
    %74 = arith.maximumf %72, %73 : vector<8x128xf32>
    %c9_i32_22 = arith.constant 9 : i32
    %75 = tpu.dynamic_rotate %74 by %c9_i32_22 dim 1 : vector<8x128xf32>, i32 -> vector<8x128xf32>
    %76 = vector.extract_strided_slice %11 {offsets = [0, 0], sizes = [1, 128], strides = [1, 1]} : vector<9x128xf32> to vector<1x128xf32>
    %77 = vector.broadcast %76 : vector<1x128xf32> to vector<8x128xf32>
    %78 = arith.mulf %75, %77 : vector<8x128xf32>
    %c8_i32_23 = arith.constant 8 : i32
    %79 = tpu.dynamic_rotate %74 by %c8_i32_23 dim 1 : vector<8x128xf32>, i32 -> vector<8x128xf32>
    %80 = vector.extract_strided_slice %11 {offsets = [1, 0], sizes = [1, 128], strides = [1, 1]} : vector<9x128xf32> to vector<1x128xf32>
    %81 = vector.broadcast %80 : vector<1x128xf32> to vector<8x128xf32>
    %82 = arith.mulf %79, %81 : vector<8x128xf32>
    %c7_i32_24 = arith.constant 7 : i32
    %83 = tpu.dynamic_rotate %74 by %c7_i32_24 dim 1 : vector<8x128xf32>, i32 -> vector<8x128xf32>
    %84 = vector.extract_strided_slice %11 {offsets = [2, 0], sizes = [1, 128], strides = [1, 1]} : vector<9x128xf32> to vector<1x128xf32>
    %85 = vector.broadcast %84 : vector<1x128xf32> to vector<8x128xf32>
    %86 = arith.mulf %83, %85 : vector<8x128xf32>
    %c1_i32_25 = arith.constant 1 : i32
    %87 = tpu.dynamic_rotate %74 by %c1_i32_25 dim 1 : vector<8x128xf32>, i32 -> vector<8x128xf32>
    %88 = vector.extract_strided_slice %11 {offsets = [3, 0], sizes = [1, 128], strides = [1, 1]} : vector<9x128xf32> to vector<1x128xf32>
    %89 = vector.broadcast %88 : vector<1x128xf32> to vector<8x128xf32>
    %90 = arith.mulf %87, %89 : vector<8x128xf32>
    %91 = vector.extract_strided_slice %11 {offsets = [4, 0], sizes = [1, 128], strides = [1, 1]} : vector<9x128xf32> to vector<1x128xf32>
    %92 = vector.broadcast %91 : vector<1x128xf32> to vector<8x128xf32>
    %93 = arith.mulf %74, %92 : vector<8x128xf32>
    %c127_i32_26 = arith.constant 127 : i32
    %94 = tpu.dynamic_rotate %74 by %c127_i32_26 dim 1 : vector<8x128xf32>, i32 -> vector<8x128xf32>
    %95 = vector.extract_strided_slice %11 {offsets = [5, 0], sizes = [1, 128], strides = [1, 1]} : vector<9x128xf32> to vector<1x128xf32>
    %96 = vector.broadcast %95 : vector<1x128xf32> to vector<8x128xf32>
    %97 = arith.mulf %94, %96 : vector<8x128xf32>
    %c121_i32_27 = arith.constant 121 : i32
    %98 = tpu.dynamic_rotate %74 by %c121_i32_27 dim 1 : vector<8x128xf32>, i32 -> vector<8x128xf32>
    %99 = vector.extract_strided_slice %11 {offsets = [6, 0], sizes = [1, 128], strides = [1, 1]} : vector<9x128xf32> to vector<1x128xf32>
    %100 = vector.broadcast %99 : vector<1x128xf32> to vector<8x128xf32>
    %101 = arith.mulf %98, %100 : vector<8x128xf32>
    %c120_i32_28 = arith.constant 120 : i32
    %102 = tpu.dynamic_rotate %74 by %c120_i32_28 dim 1 : vector<8x128xf32>, i32 -> vector<8x128xf32>
    %103 = vector.extract_strided_slice %11 {offsets = [7, 0], sizes = [1, 128], strides = [1, 1]} : vector<9x128xf32> to vector<1x128xf32>
    %104 = vector.broadcast %103 : vector<1x128xf32> to vector<8x128xf32>
    %105 = arith.mulf %102, %104 : vector<8x128xf32>
    %c119_i32_29 = arith.constant 119 : i32
    %106 = tpu.dynamic_rotate %74 by %c119_i32_29 dim 1 : vector<8x128xf32>, i32 -> vector<8x128xf32>
    %107 = vector.extract_strided_slice %11 {offsets = [8, 0], sizes = [1, 128], strides = [1, 1]} : vector<9x128xf32> to vector<1x128xf32>
    %108 = vector.broadcast %107 : vector<1x128xf32> to vector<8x128xf32>
    %109 = arith.mulf %106, %108 : vector<8x128xf32>
    %110 = tpu.concatenate %78, %82, %86, %90, %93, %97, %101, %105, %109 in 0 : vector<8x128xf32>, vector<8x128xf32>, vector<8x128xf32>, vector<8x128xf32>, vector<8x128xf32>, vector<8x128xf32>, vector<8x128xf32>, vector<8x128xf32>, vector<8x128xf32> -> vector<72x128xf32>
    %c0_30 = arith.constant 0 : index
    %c0_31 = arith.constant 0 : index
    %111 = vector.load %arg5[%c0_30, %c0_31] : memref<8x72xf32, #tpu.memory_space<vmem>>, vector<8x72xf32>
    %cst_32 = arith.constant dense<0.000000e+00> : vector<8x128xf32>
    %112 = tpu.matmul %111, %110, %cst_32 {dimension_numbers = #tpu.dot_dimension_numbers<[1], [0], [0], [1], [0, 0, 1, 1], [], []>} : vector<8x72xf32>, vector<72x128xf32>, vector<8x128xf32> -> vector<8x128xf32>
    %cst_33 = arith.constant dense<0.000000e+00> : vector<8xf32>
    %113 = vector.multi_reduction <add>, %112, %cst_33 [1] : vector<8x128xf32> to vector<8xf32>
    %114 = vector.shape_cast %113 : vector<8xf32> to vector<8x1xf32>
    %115 = arith.mulf %112, %112 : vector<8x128xf32>
    %cst_34 = arith.constant dense<0.000000e+00> : vector<8xf32>
    %116 = vector.multi_reduction <add>, %115, %cst_34 [1] : vector<8x128xf32> to vector<8xf32>
    %117 = vector.shape_cast %116 : vector<8xf32> to vector<8x1xf32>
    %cst_35 = arith.constant 7.812500e-03 : f32
    %118 = vector.broadcast %cst_35 : f32 to vector<8x1xf32>
    %119 = arith.mulf %114, %118 : vector<8x1xf32>
    %cst_36 = arith.constant 7.812500e-03 : f32
    %120 = vector.broadcast %cst_36 : f32 to vector<8x1xf32>
    %121 = arith.mulf %117, %120 : vector<8x1xf32>
    %122 = arith.mulf %119, %119 : vector<8x1xf32>
    %123 = arith.subf %121, %122 : vector<8x1xf32>
    %c0_37 = arith.constant 0 : index
    %c0_38 = arith.constant 0 : index
    %124 = vector.load %arg6[%c0_37, %c0_38] : memref<8x1xf32, #tpu.memory_space<vmem>>, vector<8x1xf32>
    %cst_39 = arith.constant 9.99999974E-6 : f32
    %125 = vector.broadcast %cst_39 : f32 to vector<8x1xf32>
    %126 = arith.addf %123, %125 : vector<8x1xf32>
    %127 = math.rsqrt %126 : vector<8x1xf32>
    %128 = arith.mulf %124, %127 : vector<8x1xf32>
    %c0_40 = arith.constant 0 : index
    %c0_41 = arith.constant 0 : index
    %129 = vector.load %arg7[%c0_40, %c0_41] : memref<8x1xf32, #tpu.memory_space<vmem>>, vector<8x1xf32>
    %130 = arith.mulf %119, %128 : vector<8x1xf32>
    %131 = arith.subf %129, %130 : vector<8x1xf32>
    %132 = vector.broadcast %128 : vector<8x1xf32> to vector<8x128xf32>
    %133 = arith.mulf %112, %132 : vector<8x128xf32>
    %134 = vector.broadcast %131 : vector<8x1xf32> to vector<8x128xf32>
    %135 = arith.addf %133, %134 : vector<8x128xf32>
    %cst_42 = arith.constant 0.000000e+00 : f32
    %136 = vector.broadcast %cst_42 : f32 to vector<8x128xf32>
    %137 = arith.maximumf %135, %136 : vector<8x128xf32>
    %c0_43 = arith.constant 0 : index
    %c0_44 = arith.constant 0 : index
    %138 = vector.load %arg8[%c0_43, %c0_44] : memref<8x128xf32, #tpu.memory_space<vmem>>, vector<8x128xf32>
    tpu.vector_store %arg8[%c0_43, %c0_44], %137 {strides = array<i32>} : memref<8x128xf32, #tpu.memory_space<vmem>>, vector<8x128xf32>,
    return
  }
}

</mosaic_0001>

<llo_original>
// kernel: down_forward.1
$region0: #{down_forward.1}
  #allocation0 [shape = 'u32[]', space=smem, size = 0x4, offset = 0x4, fixed_abs, tag = 'smem constant byte address 0x4 - core index']
  #allocation1 [shape = 'u32[144,128]{1,0:T(1,128)}', space=vmem, size = 0x12000, scoped, tag = 'internal scratch']
  %s0 = inlined_call_operand.vmem [shape: f32[4,8,128], index: 0, kind: input, shape index: {}]
  %s1 = inlined_call_operand.vmem [shape: f32[9,128], index: 1, kind: input, shape index: {}]
  %s2 = inlined_call_operand.vmem [shape: f32[8,72], index: 2, kind: input, shape index: {}]
  %s3 = inlined_call_operand.vmem [shape: f32[8,1], index: 3, kind: input, shape index: {}]
  %s4 = inlined_call_operand.vmem [shape: f32[8,1], index: 4, kind: input, shape index: {}]
  %s5 = inlined_call_operand.vmem [shape: f32[8,72], index: 5, kind: input, shape index: {}]
  %s6 = inlined_call_operand.vmem [shape: f32[8,1], index: 6, kind: input, shape index: {}]
  %s7 = inlined_call_operand.vmem [shape: f32[8,1], index: 7, kind: input, shape index: {}]
  %s8 = inlined_call_operand.vmem [shape: f32[8,128], index: 8, kind: output, shape index: {}]
  %s9 = sld [smem:[#allocation0]]
  $region42: #{down_forward.1} parent=0
    _
  %s11 = ssub.s32 1, %s9
  %s12 = scalar_select 0, %s11, %s9
  // Predicated region
  $region2: #{down_forward.1} parent=0 // pred_check
    _
  $region3: #{down_forward.1} parent=0 // pred_check_branch
    %14 = sbr.rel (0) target = $region5
  $region4: #{down_forward.1} parent=0 // pred_region
    _
  $region5: #{down_forward.1} parent=0 // pred_fallthru
    _
  // Predicated region
  $region6: #{down_forward.1} parent=0 // pred_check
    _
  $region7: #{down_forward.1} parent=0 // pred_check_branch
    %16 = sbr.rel (0) target = $region9
  $region8: #{down_forward.1} parent=0 // pred_region
    _
  $region9: #{down_forward.1} parent=0 // pred_fallthru
    _
  // Predicated region
  $region10: #{down_forward.1} parent=0 // pred_check
    _
  $region11: #{down_forward.1} parent=0 // pred_check_branch
    %18 = sbr.rel (0) target = $region13
  $region12: #{down_forward.1} parent=0 // pred_region
    _
  $region13: #{down_forward.1} parent=0 // pred_fallthru
    _
  // Predicated region
  $region14: #{down_forward.1} parent=0 // pred_check
    _
  $region15: #{down_forward.1} parent=0 // pred_check_branch
    %20 = sbr.rel (0) target = $region17
  $region16: #{down_forward.1} parent=0 // pred_region
    _
  $region17: #{down_forward.1} parent=0 // pred_fallthru
    _
  // Predicated region
  $region18: #{down_forward.1} parent=0 // pred_check
    _
  $region19: #{down_forward.1} parent=0 // pred_check_branch
    %22 = sbr.rel (0) target = $region21
  $region20: #{down_forward.1} parent=0 // pred_region
    _
  $region21: #{down_forward.1} parent=0 // pred_fallthru
    _
  // Predicated region
  $region22: #{down_forward.1} parent=0 // pred_check
    _
  $region23: #{down_forward.1} parent=0 // pred_check_branch
    %24 = sbr.rel (0) target = $region25
  $region24: #{down_forward.1} parent=0 // pred_region
    _
  $region25: #{down_forward.1} parent=0 // pred_fallthru
    _
  // Predicated region
  $region26: #{down_forward.1} parent=0 // pred_check
    _
  $region27: #{down_forward.1} parent=0 // pred_check_branch
    %26 = sbr.rel (0) target = $region29
  $region28: #{down_forward.1} parent=0 // pred_region
    _
  $region29: #{down_forward.1} parent=0 // pred_fallthru
    _
  // Predicated region
  $region30: #{down_forward.1} parent=0 // pred_check
    _
  $region31: #{down_forward.1} parent=0 // pred_check_branch
    %28 = sbr.rel (0) target = $region33
  $region32: #{down_forward.1} parent=0 // pred_region
    _
  $region33: #{down_forward.1} parent=0 // pred_fallthru
    _
  %v29 = vld [vmem:[%s0] sm:$0xff]
  %s30 = scalar_lea.vmem %s0, 8
  %v31 = vld [vmem:[%s30] sm:$0xff]
  %v32 = vmax.f32 %v29, %v31
  %s33 = scalar_lea.vmem %s0, 16
  %v34 = vld [vmem:[%s33] sm:$0xff]
  %s35 = scalar_lea.vmem %s0, 24
  %v36 = vld [vmem:[%s35] sm:$0xff]
  %v37 = vmax.f32 %v34, %v36
  %v38 = vmax.f32 %v32, %v37
  %v39 = vld [vmem:[%s1] sm:$0xff]
  %v40 = vld [vmem:[%s1 + $0x8] sm:$0x1]
  %41 = vrot.lane.b32.xlu0 %v38, 9
  %v42 = vpop.permute.xlu0 %41
  %v43 = vlaneseq
  %v44 = vshrl.u32 %v43, 7
  %v45 = vsub.s32 0, %v44
  %v46 = vrot.slane %v39, %v45
  %v47 = vmul.f32 %v42, %v46
  %48 = vrot.lane.b32.xlu0 %v38, 8
  %v49 = vpop.permute.xlu0 %48
  %v50 = vlaneseq
  %v51 = vshrl.u32 %v50, 7
  %v52 = vsub.s32 1, %v51
  %v53 = vrot.slane %v39, %v52
  %v54 = vmul.f32 %v49, %v53
  %55 = vrot.lane.b32.xlu0 %v38, 7
  %v56 = vpop.permute.xlu0 %55
  %v57 = vlaneseq
  %v58 = vshrl.u32 %v57, 7
  %v59 = vsub.s32 2, %v58
  %v60 = vrot.slane %v39, %v59
  %v61 = vmul.f32 %v56, %v60
  %62 = vrot.lane.b32.xlu0 %v38, 1
  %v63 = vpop.permute.xlu0 %62
  %v64 = vlaneseq
  %v65 = vshrl.u32 %v64, 7
  %v66 = vsub.s32 3, %v65
  %v67 = vrot.slane %v39, %v66
  %v68 = vmul.f32 %v63, %v67
  %v69 = vlaneseq
  %v70 = vshrl.u32 %v69, 7
  %v71 = vsub.s32 4, %v70
  %v72 = vrot.slane %v39, %v71
  %v73 = vmul.f32 %v38, %v72
  %74 = vrot.lane.b32.xlu0 %v38, 127
  %v75 = vpop.permute.xlu0 %74
  %v76 = vlaneseq
  %v77 = vshrl.u32 %v76, 7
  %v78 = vsub.s32 5, %v77
  %v79 = vrot.slane %v39, %v78
  %v80 = vmul.f32 %v75, %v79
  %81 = vrot.lane.b32.xlu0 %v38, 121
  %v82 = vpop.permute.xlu0 %81
  %v83 = vlaneseq
  %v84 = vshrl.u32 %v83, 7
  %v85 = vsub.s32 6, %v84
  %v86 = vrot.slane %v39, %v85
  %v87 = vmul.f32 %v82, %v86
  %88 = vrot.lane.b32.xlu0 %v38, 120
  %v89 = vpop.permute.xlu0 %88
  %v90 = vlaneseq
  %v91 = vshrl.u32 %v90, 7
  %v92 = vsub.s32 7, %v91
  %v93 = vrot.slane %v39, %v92
  %v94 = vmul.f32 %v89, %v93
  %95 = vrot.lane.b32.xlu0 %v38, 119
  %v96 = vpop.permute.xlu0 %95
  %v97 = vlaneseq
  %v98 = vshrl.u32 %v97, 7
  %v99 = vsub.s32 0, %v98
  %v100 = vrot.slane %v40, %v99
  %v101 = vmul.f32 %v96, %v100
  %v102 = vld [vmem:[%s2] sm:$0xff]
  %vm103 = vcmask 588800
  %v105 = vsel %vm103, %v102, 0
  %107 = vmatprep.subr.mxu0 0.0
  %108 = vmatpush1.msra.mxu0 %v47
  %109 = vmatprep.subr.mxu0 0.0
  %110 = vmatpush1.msra.mxu0 %v54
  %111 = vmatprep.subr.mxu0 0.0
  %112 = vmatpush1.msra.mxu0 %v61
  %113 = vmatprep.subr.mxu0 0.0
  %114 = vmatpush1.msra.mxu0 %v68
  %115 = vmatprep.subr.mxu0 0.0
  %116 = vmatpush1.msra.mxu0 %v73
  %117 = vmatprep.subr.mxu0 0.0
  %118 = vmatpush1.msra.mxu0 %v80
  %119 = vmatprep.subr.mxu0 0.0
  %120 = vmatpush1.msra.mxu0 %v87
  %121 = vmatprep.subr.mxu0 0.0
  %122 = vmatpush1.msra.mxu0 %v94
  %123 = vmatprep.subr.mxu0 0.0
  %124 = vmatpush1.msra.mxu0 %v101
  %125 = vmatprep.subr.mxu0 0.0
  %126 = vmatpush1.msra.mxu0 0.0
  %127 = vmatprep.subr.mxu0 0.0
  %128 = vmatpush1.msra.mxu0 0.0
  %129 = vmatprep.subr.mxu0 0.0
  %130 = vmatpush1.msra.mxu0 0.0
  %131 = vmatprep.subr.mxu0 0.0
  %132 = vmatpush1.msra.mxu0 0.0
  %133 = vmatprep.subr.mxu0 0.0
  %134 = vmatpush1.msra.mxu0 0.0
  %135 = vmatprep.subr.mxu0 0.0
  %136 = vmatpush1.msra.mxu0 0.0
  %137 = vmatprep.subr.mxu0 0.0
  %138 = vmatpush1.msra.mxu0 0.0
  %139 = vmatprep.subr.mxu0 0.0
  %140 = vmatpush1.msra.mxu0 0.0
  %141 = vmatprep.subr.mxu0 0.0
  %142 = vmatpush1.msra.mxu0 0.0
  %143 = vmatprep.subr.mxu0 0.0
  %144 = vmatpush1.msra.mxu0 0.0
  %145 = vmatprep.subr.mxu0 0.0
  %146 = vmatpush1.msra.mxu0 0.0
  %147 = vmatprep.subr.mxu0 0.0
  %148 = vmatpush1.msra.mxu0 0.0
  %149 = vmatprep.subr.mxu0 0.0
  %150 = vmatpush1.msra.mxu0 0.0
  %151 = vmatprep.subr.mxu0 0.0
  %152 = vmatpush1.msra.mxu0 0.0
  %153 = vmatprep.subr.mxu0 0.0
  %154 = vmatpush1.msra.mxu0 0.0
  %155 = vmatprep.subr.mxu0 0.0
  %156 = vmatpush1.msra.mxu0 0.0
  %157 = vmatprep.subr.mxu0 0.0
  %158 = vmatpush1.msra.mxu0 0.0
  %159 = vmatprep.subr.mxu0 0.0
  %160 = vmatpush1.msra.mxu0 0.0
  %161 = vmatprep.subr.mxu0 0.0
  %162 = vmatpush1.msra.mxu0 0.0
  %163 = vmatprep.subr.mxu0 0.0
  %164 = vmatpush1.msra.mxu0 0.0
  %165 = vmatprep.subr.mxu0 0.0
  %166 = vmatpush1.msra.mxu0 0.0
  %167 = vmatprep.subr.mxu0 0.0
  %168 = vmatpush1.msra.mxu0 0.0
  %169 = vmatprep.subr.mxu0 0.0
  %170 = vmatpush1.msra.mxu0 0.0
  %171 = vmatprep.mubr.f32.mxu0 0.0
  %172 = vmatmul.mubr.f32.gmra.mrb[0].mxu0 %v105
  %v173 = vpop.f32.mrb[0].mxu0
  %v174 = vadd.f32 0.0, %v173
  %v175 = vpop.f32.mrb[0].mxu0
  %176 = vdwg.mxu0
  %177 = vadd.xlane.f32.xlu0 %v174
  %v178 = vpop.xlane.xlu0 %177
  %v179 = vmul.f32 %v174, %v174
  %180 = vadd.xlane.f32.xlu0 %v179
  %v181 = vpop.xlane.xlu0 %180
  %v182 = vmul.f32 %v178, 0.0078125
  %v183 = vmul.f32 %v181, 0.0078125
  %v184 = vmul.f32 %v182, %v182
  %v185 = vsub.f32 %v183, %v184
  %v186 = vld [vmem:[%s3] sm:$0xff]
  %v187 = vadd.f32 %v185, 1e-05
  %v188 = vrsqrt.pop %v187
  %v189 = vmul.f32 %v186, %v188
  %v190 = vld [vmem:[%s4] sm:$0xff]
  %v191 = vmul.f32 %v182, %v189
  %v192 = vsub.f32 %v190, %v191
  %194 = vset.pattern.permute.xlu0 0
  %195 = vperm.xlu0 %194, %v189
  %v196 = vpop.permute.xlu0 %195
  %v198 = vmul.f32 %v174, %v196
  %200 = vset.pattern.permute.xlu0 0
  %201 = vperm.xlu0 %200, %v192
  %v202 = vpop.permute.xlu0 %201
  %v204 = vadd.f32 %v198, %v202
  %v205 = vmax.f32 %v204, 0.0
  %206 = vrot.lane.b32.xlu0 %v205, 9
  %v207 = vpop.permute.xlu0 %206
  %v208 = vmul.f32 %v207, %v46
  %209 = vrot.lane.b32.xlu0 %v205, 8
  %v210 = vpop.permute.xlu0 %209
  %v211 = vmul.f32 %v210, %v53
  %212 = vrot.lane.b32.xlu0 %v205, 7
  %v213 = vpop.permute.xlu0 %212
  %v214 = vmul.f32 %v213, %v60
  %215 = vrot.lane.b32.xlu0 %v205, 1
  %v216 = vpop.permute.xlu0 %215
  %v217 = vmul.f32 %v216, %v67
  %v218 = vmul.f32 %v205, %v72
  %219 = vrot.lane.b32.xlu0 %v205, 127
  %v220 = vpop.permute.xlu0 %219
  %v221 = vmul.f32 %v220, %v79
  %222 = vrot.lane.b32.xlu0 %v205, 121
  %v223 = vpop.permute.xlu0 %222
  %v224 = vmul.f32 %v223, %v86
  %225 = vrot.lane.b32.xlu0 %v205, 120
  %v226 = vpop.permute.xlu0 %225
  %v227 = vmul.f32 %v226, %v93
  %228 = vrot.lane.b32.xlu0 %v205, 119
  %v229 = vpop.permute.xlu0 %228
  %v230 = vmul.f32 %v229, %v100
  %v231 = vld [vmem:[%s5] sm:$0xff]
  %v233 = vsel %vm103, %v231, 0
  %235 = vmatprep.subr.mxu0 0.0
  %236 = vmatpush1.msra.mxu0 %v208
  %237 = vmatprep.subr.mxu0 0.0
  %238 = vmatpush1.msra.mxu0 %v211
  %239 = vmatprep.subr.mxu0 0.0
  %240 = vmatpush1.msra.mxu0 %v214
  %241 = vmatprep.subr.mxu0 0.0
  %242 = vmatpush1.msra.mxu0 %v217
  %243 = vmatprep.subr.mxu0 0.0
  %244 = vmatpush1.msra.mxu0 %v218
  %245 = vmatprep.subr.mxu0 0.0
  %246 = vmatpush1.msra.mxu0 %v221
  %247 = vmatprep.subr.mxu0 0.0
  %248 = vmatpush1.msra.mxu0 %v224
  %249 = vmatprep.subr.mxu0 0.0
  %250 = vmatpush1.msra.mxu0 %v227
  %251 = vmatprep.subr.mxu0 0.0
  %252 = vmatpush1.msra.mxu0 %v230
  %253 = vmatprep.subr.mxu0 0.0
  %254 = vmatpush1.msra.mxu0 0.0
  %255 = vmatprep.subr.mxu0 0.0
  %256 = vmatpush1.msra.mxu0 0.0
  %257 = vmatprep.subr.mxu0 0.0
  %258 = vmatpush1.msra.mxu0 0.0
  %259 = vmatprep.subr.mxu0 0.0
  %260 = vmatpush1.msra.mxu0 0.0
  %261 = vmatprep.subr.mxu0 0.0
  %262 = vmatpush1.msra.mxu0 0.0
  %263 = vmatprep.subr.mxu0 0.0
  %264 = vmatpush1.msra.mxu0 0.0
  %265 = vmatprep.subr.mxu0 0.0
  %266 = vmatpush1.msra.mxu0 0.0
  %267 = vmatprep.subr.mxu0 0.0
  %268 = vmatpush1.msra.mxu0 0.0
  %269 = vmatprep.subr.mxu0 0.0
  %270 = vmatpush1.msra.mxu0 0.0
  %271 = vmatprep.subr.mxu0 0.0
  %272 = vmatpush1.msra.mxu0 0.0
  %273 = vmatprep.subr.mxu0 0.0
  %274 = vmatpush1.msra.mxu0 0.0
  %275 = vmatprep.subr.mxu0 0.0
  %276 = vmatpush1.msra.mxu0 0.0
  %277 = vmatprep.subr.mxu0 0.0
  %278 = vmatpush1.msra.mxu0 0.0
  %279 = vmatprep.subr.mxu0 0.0
  %280 = vmatpush1.msra.mxu0 0.0
  %281 = vmatprep.subr.mxu0 0.0
  %282 = vmatpush1.msra.mxu0 0.0
  %283 = vmatprep.subr.mxu0 0.0
  %284 = vmatpush1.msra.mxu0 0.0
  %285 = vmatprep.subr.mxu0 0.0
  %286 = vmatpush1.msra.mxu0 0.0
  %287 = vmatprep.subr.mxu0 0.0
  %288 = vmatpush1.msra.mxu0 0.0
  %289 = vmatprep.subr.mxu0 0.0
  %290 = vmatpush1.msra.mxu0 0.0
  %291 = vmatprep.subr.mxu0 0.0
  %292 = vmatpush1.msra.mxu0 0.0
  %293 = vmatprep.subr.mxu0 0.0
  %294 = vmatpush1.msra.mxu0 0.0
  %295 = vmatprep.subr.mxu0 0.0
  %296 = vmatpush1.msra.mxu0 0.0
  %297 = vmatprep.subr.mxu0 0.0
  %298 = vmatpush1.msra.mxu0 0.0
  %299 = vmatprep.mubr.f32.mxu0 0.0
  %300 = vmatmul.mubr.f32.gmra.mrb[0].mxu0 %v233
  %v301 = vpop.f32.mrb[0].mxu0
  %v302 = vadd.f32 0.0, %v301
  %v303 = vpop.f32.mrb[0].mxu0
  %304 = vdwg.mxu0
  %305 = vadd.xlane.f32.xlu0 %v302
  %v306 = vpop.xlane.xlu0 %305
  %v307 = vmul.f32 %v302, %v302
  %308 = vadd.xlane.f32.xlu0 %v307
  %v309 = vpop.xlane.xlu0 %308
  %v310 = vmul.f32 %v306, 0.0078125
  %v311 = vmul.f32 %v309, 0.0078125
  %v312 = vmul.f32 %v310, %v310
  %v313 = vsub.f32 %v311, %v312
  %v314 = vld [vmem:[%s6] sm:$0xff]
  %v315 = vadd.f32 %v313, 1e-05
  %v316 = vrsqrt.pop %v315
  %v317 = vmul.f32 %v314, %v316
  %v318 = vld [vmem:[%s7] sm:$0xff]
  %v319 = vmul.f32 %v310, %v317
  %v320 = vsub.f32 %v318, %v319
  %322 = vset.pattern.permute.xlu0 0
  %323 = vperm.xlu0 %322, %v317
  %v324 = vpop.permute.xlu0 %323
  %v326 = vmul.f32 %v302, %v324
  %328 = vset.pattern.permute.xlu0 0
  %329 = vperm.xlu0 %328, %v320
  %v330 = vpop.permute.xlu0 %329
  %v332 = vadd.f32 %v326, %v330
  %v333 = vmax.f32 %v332, 0.0
  %334 = vst [vmem:[%s8] sm:$0xff] %v333
  // Predicated region
  $region34: #{down_forward.1} parent=0 // pred_check
    _
  $region35: #{down_forward.1} parent=0 // pred_check_branch
    %336 = sbr.rel (0) target = $region37
  $region36: #{down_forward.1} parent=0 // pred_region
    _
  $region37: #{down_forward.1} parent=0 // pred_fallthru
    _
  // Predicated region
  $region38: #{down_forward.1} parent=0 // pred_check
    _
  $region39: #{down_forward.1} parent=0 // pred_check_branch
    %338 = sbr.rel (0) target = $region41
  $region40: #{down_forward.1} parent=0 // pred_region
    _
  $region41: #{down_forward.1} parent=0 // pred_fallthru
    _

</llo_original>
